<compile_context>
chip_gen: v7x
topology: tpu7x:2x2x1
jax: 0.10.0
libtpu: 0.0.40
codegen_flags: <defaults>
</compile_context>

<pallas_src>
import functools

import jax
import jax.numpy as jnp
from jax import lax
from jax.experimental import pallas as pl
from jax.experimental.pallas import tpu as pltpu


_INV_SQRT2 = 0.7071067811865476
_SQRT_2_OVER_PI = 0.7978845608028654

_LANE = 128
_MXU_M = 128          # never tile the token axis below a full MXU row block


def _round_up(n, m):
    return ((n + m - 1) // m) * m


def _cdiv(a, b):
    return (a + b - 1) // b


def _gelu_f32(x, approximate):
    # x is the f32 matmul accumulator.
    if approximate:
        # tanh form routes the transcendental through the EUP slot (idle when MXU-bound).
        return 0.5 * x * (1.0 + jnp.tanh(_SQRT_2_OVER_PI * (x + 0.044715 * x * x * x)))
    # exact erf — parity with PyTorch nn.GELU() default.
    return 0.5 * x * (1.0 + lax.erf(x * _INV_SQRT2))


def _vmem_capacity_bytes():
    try:
        info = pltpu.get_tpu_info()
        cap = getattr(info, "vmem_capacity_bytes", None)
        if cap:
            return int(cap)
    except Exception:
        pass
    return 128 * 1024 * 1024  # conservative fallback (v5e/v6e)


# ----------------------------- kernels ---------------------------------------


def _mlp_kernel_resident(x_ref, w1_ref, b1_ref, w2_ref, b2_ref, o_ref, *, approximate):
    # fc1 on the MXU, f32 accumulation.  x is cast at the matmul boundary (free under
    # MXU slack) instead of in the wrapper (which would cost an extra HBM pass).
    h = jnp.dot(x_ref[...].astype(w1_ref.dtype), w1_ref[...],
                preferred_element_type=jnp.float32)
    h = _gelu_f32(h + b1_ref[...], approximate)
    y = jnp.dot(h.astype(w2_ref.dtype), w2_ref[...],
                preferred_element_type=jnp.float32)
    o_ref[...] = _gelu_f32(y + b2_ref[...], approximate).astype(o_ref.dtype)


def _mlp_kernel_hidden_tiled(x_ref, w1_ref, b1_ref, w2_ref, b2_ref, o_ref, acc_ref, *,
                             approximate):
    # Grid = (M tiles, hidden tiles); hidden axis is the reduction ("arbitrary", last).
    k = pl.program_id(1)

    @pl.when(k == 0)
    def _():
        acc_ref[...] = jnp.zeros_like(acc_ref)

    h = jnp.dot(x_ref[...].astype(w1_ref.dtype), w1_ref[...],
                preferred_element_type=jnp.float32)
    h = _gelu_f32(h + b1_ref[...], approximate)
    acc_ref[...] += jnp.dot(h.astype(w2_ref.dtype), w2_ref[...],
                            preferred_element_type=jnp.float32)

    @pl.when(k == pl.num_programs(1) - 1)
    def _():
        o_ref[...] = _gelu_f32(acc_ref[...] + b2_ref[...], approximate).astype(o_ref.dtype)


# ----------------------------- wrapper ----------------------------------------


def mlp_pallas(x, w1, b1, w2, b2, *, tm=256, matmul_dtype=None,
               approximate_gelu=True, vmem_cap_bytes=None,
               force_hidden_tiling=False):
    """MLP forward: GELU(GELU(x @ w1 + b1) @ w2 + b2).

    x:  (B, N, in_dim)
    w1: (in_dim, hidden_dim)   (transpose of PyTorch nn.Linear weight layout)
    w2: (hidden_dim, out_dim)
    """
    out_dtype = x.dtype
    B, N, in_dim = x.shape
    hidden_dim = w1.shape[1]
    out_dim = w2.shape[1]
    M = B * N

    w_dtype = jnp.dtype(out_dtype if matmul_dtype is None else matmul_dtype)
    w_itemsize = w_dtype.itemsize
    x_itemsize = jnp.dtype(out_dtype).itemsize

    in_p = _round_up(in_dim, _LANE)
    hid_p = _round_up(hidden_dim, _LANE)
    out_p = _round_up(out_dim, _LANE)

    # sublane packing for the token (row) axis of the x / out tiles
    sub = max(8, 32 // x_itemsize)

    # ---- generation-aware VMEM budget (v5e/v6e: 128 MiB; v7x: 64 MiB per TC) ----
    vmem_capacity = _vmem_capacity_bytes()
    if vmem_cap_bytes is None:
        vmem_cap_bytes = (vmem_capacity * 3) // 4      # ~96 MiB / ~48 MiB
    vmem_cap = min(int(vmem_cap_bytes), vmem_capacity - 8 * 2**20)

    # ---- VMEM footprint estimates ----
    def est_resident(tm_):
        w_bytes = (in_p * hid_p + hid_p * out_p) * w_itemsize          # single-buffered
        b_bytes = (hid_p + out_p) * 4
        io_bytes = 2 * tm_ * (in_p * x_itemsize + out_p * x_itemsize)  # double-buffered tiles
        mid_bytes = tm_ * hid_p * (4 + w_itemsize)                     # f32 h + one cast copy
        return w_bytes + b_bytes + io_bytes + mid_bytes

    def est_tiled(tm_, th_):
        w_bytes = 2 * (in_p * th_ + th_ * out_p) * w_itemsize          # double-buffered tiles
        b_bytes = 2 * th_ * 4 + out_p * 4
        io_bytes = 2 * tm_ * (in_p * x_itemsize + out_p * x_itemsize)
        acc_bytes = tm_ * out_p * 4
        mid_bytes = tm_ * th_ * (4 + w_itemsize)
        return w_bytes + b_bytes + io_bytes + acc_bytes + mid_bytes

    # ---- M-tile selection: keep it a full MXU multiple (>=128) ----
    if M <= _MXU_M:
        tm_sel = _round_up(max(M, 1), sub)             # tiny workload: one small tile
    else:
        tm_sel = max(_MXU_M, _round_up(min(tm, _round_up(M, sub)), _MXU_M))
        # v7x has 2 TCs sharing the "parallel" M axis: prefer a few grid steps of
        # pipeline/core overlap before maximizing the tile.
        while tm_sel > _MXU_M and _cdiv(M, tm_sel) < 4:
            tm_sel -= _MXU_M
        # Shrink in full-MXU steps if resident weights + tiles overflow the budget;
        # never below 128 — below that we switch strategy instead.
        while tm_sel > _MXU_M and est_resident(tm_sel) > vmem_cap:
            tm_sel -= _MXU_M
    tm = tm_sel
    M_p = _round_up(max(M, 1), tm)

    use_hidden_tiling = force_hidden_tiling or est_resident(tm) > vmem_cap
    if use_hidden_tiling:
        # Largest hidden tile (multiple of 128, divisor of hid_p) that fits the budget.
        n_blocks = hid_p // _LANE
        th = _LANE
        for d in range(1, n_blocks + 1):
            if n_blocks % d == 0:
                cand = d * _LANE
                if cand > th and est_tiled(tm, cand) <= vmem_cap:
                    th = cand
        est = est_tiled(tm, th)
    else:
        th = hid_p
        est = est_resident(tm)
    # TODO(synk): for extremely large in_dim the (tm, in_p) x tile itself may dominate
    # VMEM; a K-axis for fc1 (analogous to the hidden axis) would be the next step.

    # ---- zero-pad to lane-dense feature dims / tile-multiple token count (no-op when
    #      already aligned).  Exact: GELU(0)=0 and padded hidden rows of w2 are zero. ----
    def pad2(a, rows, cols):
        pr, pc = rows - a.shape[0], cols - a.shape[1]
        return a if (pr == 0 and pc == 0) else jnp.pad(a, ((0, pr), (0, pc)))

    x2d = pad2(x.reshape(M, in_dim), M_p, in_p)                 # keep x's native dtype
    w1_p = pad2(w1, in_p, hid_p).astype(w_dtype)
    w2_p = pad2(w2, hid_p, out_p).astype(w_dtype)
    b1_p = pad2(b1.astype(jnp.float32).reshape(1, -1), 1, hid_p)
    b2_p = pad2(b2.astype(jnp.float32).reshape(1, -1), 1, out_p)

    vmem_limit = int(min(vmem_capacity - 8 * 2**20,
                         max(32 * 2**20, est + 16 * 2**20)))

    resident = pl.Buffered(1)   # constant index_map => fetched once; no 2nd buffer

    if not use_hidden_tiling:
        kernel = functools.partial(_mlp_kernel_resident, approximate=approximate_gelu)
        grid = (M_p // tm,)
        in_specs = [
            pl.BlockSpec((tm, in_p), lambda i: (i, 0)),
            pl.BlockSpec((in_p, hid_p), lambda i: (0, 0), pipeline_mode=resident),
            pl.BlockSpec((1, hid_p), lambda i: (0, 0), pipeline_mode=resident),
            pl.BlockSpec((hid_p, out_p), lambda i: (0, 0), pipeline_mode=resident),
            pl.BlockSpec((1, out_p), lambda i: (0, 0), pipeline_mode=resident),
        ]
        out_specs = pl.BlockSpec((tm, out_p), lambda i: (i, 0))
        scratch_shapes = ()
        dims = ("parallel",)
    else:
        kernel = functools.partial(_mlp_kernel_hidden_tiled, approximate=approximate_gelu)
        grid = (M_p // tm, hid_p // th)
        in_specs = [
            pl.BlockSpec((tm, in_p), lambda i, k: (i, 0)),
            pl.BlockSpec((in_p, th), lambda i, k: (0, k)),
            pl.BlockSpec((1, th), lambda i, k: (0, k)),
            pl.BlockSpec((th, out_p), lambda i, k: (k, 0)),
            pl.BlockSpec((1, out_p), lambda i, k: (0, 0), pipeline_mode=resident),
        ]
        out_specs = pl.BlockSpec((tm, out_p), lambda i, k: (i, 0))
        scratch_shapes = (pltpu.VMEM((tm, out_p), jnp.float32),)
        dims = ("parallel", "arbitrary")

    out2d = pl.pallas_call(
        kernel,
        out_shape=jax.ShapeDtypeStruct((M_p, out_p), out_dtype),
        grid_spec=pltpu.PrefetchScalarGridSpec(
            num_scalar_prefetch=0,
            grid=grid,
            in_specs=in_specs,
            out_specs=out_specs,
            scratch_shapes=scratch_shapes,
        ),
        compiler_params=pltpu.CompilerParams(
            dimension_semantics=dims,
            vmem_limit_bytes=vmem_limit,
        ),
    )(x2d, w1_p, b1_p, w2_p, b2_p)

    if M_p != M or out_p != out_dim:
        out2d = out2d[:M, :out_dim]
    return out2d.reshape(B, N, out_dim)


def mlp_reference(x, w1, b1, w2, b2, approximate=False):
    h = jax.nn.gelu(jnp.dot(x, w1) + b1, approximate=approximate)
    return jax.nn.gelu(jnp.dot(h, w2) + b2, approximate=approximate)


if __name__ == "__main__":
    # Small shapes consistent with the module: (batch, seq, in_dim)
    B, N = 2, 8
    in_dim, hidden_dim, out_dim = 32, 64, 32

    key = jax.random.PRNGKey(0)
    kx, kw1, kb1, kw2, kb2 = jax.random.split(key, 5)

    x = jax.random.normal(kx, (B, N, in_dim), dtype=jnp.float32)

    # Deterministic params mimicking nn.Linear init (uniform +/- 1/sqrt(fan_in)),
    # stored as (in, out) = transpose of PyTorch's (out, in) weight layout.
    lim1 = 1.0 / jnp.sqrt(jnp.float32(in_dim))
    lim2 = 1.0 / jnp.sqrt(jnp.float32(hidden_dim))
    w1 = jax.random.uniform(kw1, (in_dim, hidden_dim), jnp.float32, -lim1, lim1)
    b1 = jax.random.uniform(kb1, (hidden_dim,), jnp.float32, -lim1, lim1)
    w2 = jax.random.uniform(kw2, (hidden_dim, out_dim), jnp.float32, -lim2, lim2)
    b2 = jax.random.uniform(kb2, (out_dim,), jnp.float32, -lim2, lim2)

    ref_exact = mlp_reference(x, w1, b1, w2, b2, approximate=False)
    ref_tanh = mlp_reference(x, w1, b1, w2, b2, approximate=True)

    # 1) exact-erf GELU: parity with the PyTorch module (nn.GELU() default).
    out_exact = jax.block_until_ready(
        mlp_pallas(x, w1, b1, w2, b2, approximate_gelu=False))
    assert out_exact.shape == (B, N, out_dim)
    assert jnp.allclose(out_exact, ref_exact, atol=1e-5, rtol=1e-5), "exact-GELU mismatch"

    # 2) default fast path (tanh GELU -> EUP slot).
    out_fast = jax.block_until_ready(mlp_pallas(x, w1, b1, w2, b2))
    assert jnp.allclose(out_fast, ref_tanh, atol=1e-4, rtol=1e-4), "tanh-GELU mismatch"
    assert jnp.allclose(out_fast, ref_exact, atol=5e-3, rtol=5e-3), "tanh vs erf drift"

    # 3) bf16 matmul inputs (f32 accumulation, f32 GELU); x cast in-kernel.
    out_bf16 = jax.block_until_ready(
        mlp_pallas(x, w1, b1, w2, b2, matmul_dtype=jnp.bfloat16, approximate_gelu=False))
    assert jnp.allclose(out_bf16, ref_exact, atol=5e-2, rtol=5e-2), "bf16 mismatch"

    # 4) hidden-dim tiled fallback (used when weights don't fit the VMEM budget).
    out_tiled = jax.block_until_ready(
        mlp_pallas(x, w1, b1, w2, b2, approximate_gelu=False, force_hidden_tiling=True))
    assert jnp.allclose(out_tiled, ref_exact, atol=1e-5, rtol=1e-5), "tiled-path mismatch"

    # 5) modest non-aligned shape exercising multi-step M tiling, row/lane padding, and
    #    a multi-step hidden reduction (tiny VMEM cap forces th=128, 3 k-steps).
    B2, N2 = 4, 150
    in2, hid2, out2 = 192, 384, 250
    k2 = jax.random.split(jax.random.PRNGKey(1), 5)
    x2 = jax.random.normal(k2[0], (B2, N2, in2), dtype=jnp.float32)
    l1 = 1.0 / jnp.sqrt(jnp.float32(in2))
    l2 = 1.0 / jnp.sqrt(jnp.float32(hid2))
    w1b = jax.random.uniform(k2[1], (in2, hid2), jnp.float32, -l1, l1)
    b1b = jax.random.uniform(k2[2], (hid2,), jnp.float32, -l1, l1)
    w2b = jax.random.uniform(k2[3], (hid2, out2), jnp.float32, -l2, l2)
    b2b = jax.random.uniform(k2[4], (out2,), jnp.float32, -l2, l2)
    ref2 = mlp_reference(x2, w1b, b1b, w2b, b2b, approximate=True)

    out_big = jax.block_until_ready(mlp_pallas(x2, w1b, b1b, w2b, b2b))
    assert out_big.shape == (B2, N2, out2)
    assert jnp.allclose(out_big, ref2, atol=2e-2, rtol=2e-2), "multi-tile mismatch"

    out_big_tiled = jax.block_until_ready(
        mlp_pallas(x2, w1b, b1b, w2b, b2b, force_hidden_tiling=True,
                   vmem_cap_bytes=2 * 1024 * 1024))
    assert jnp.allclose(out_big_tiled, ref2, atol=2e-2, rtol=2e-2), "k-tiled mismatch"

    print("KERNEL_OK")
</pallas_src>

<mosaic_0001>
module attributes {stable_mosaic.version = 11 : i64} {
  func.func @_mlp_kernel_resident(%arg0: i32, %arg1: memref<16x128xf32, #tpu.memory_space<vmem>>, %arg2: memref<128x128xf32, #tpu.memory_space<vmem>>, %arg3: memref<1x128xf32, #tpu.memory_space<vmem>>, %arg4: memref<128x128xf32, #tpu.memory_space<vmem>>, %arg5: memref<1x128xf32, #tpu.memory_space<vmem>>, %arg6: memref<16x128xf32, #tpu.memory_space<vmem>>) attributes {dimension_semantics = [#tpu.dimension_semantics<parallel>], iteration_bounds = array<i64: 1>, scalar_prefetch = 0 : i64, scratch_operands = 0 : i64, tpu.core_type = #tpu.core_type<tc>, window_params = [{transform_indices = @transform_0, window_bounds = array<i64: 16, 128>}, {pipeline_mode = #tpu.pipeline_mode<synchronous>, transform_indices = @transform_1, window_bounds = array<i64: 128, 128>}, {pipeline_mode = #tpu.pipeline_mode<synchronous>, transform_indices = @transform_2, window_bounds = array<i64: 1, 128>}, {pipeline_mode = #tpu.pipeline_mode<synchronous>, transform_indices = @transform_3, window_bounds = array<i64: 128, 128>}, {pipeline_mode = #tpu.pipeline_mode<synchronous>, transform_indices = @transform_4, window_bounds = array<i64: 1, 128>}, {transform_indices = @transform_5, window_bounds = array<i64: 16, 128>}]} {
    %c0 = arith.constant 0 : index
    %c0_0 = arith.constant 0 : index
    %0 = vector.load %arg1[%c0, %c0_0] : memref<16x128xf32, #tpu.memory_space<vmem>>, vector<16x128xf32>
    %c0_1 = arith.constant 0 : index
    %c0_2 = arith.constant 0 : index
    %1 = vector.load %arg2[%c0_1, %c0_2] : memref<128x128xf32, #tpu.memory_space<vmem>>, vector<128x128xf32>
    %cst = arith.constant dense<0.000000e+00> : vector<16x128xf32>
    %2 = tpu.matmul %0, %1, %cst {dimension_numbers = #tpu.dot_dimension_numbers<[1], [0], [0], [1], [0, 0, 1, 1], [], []>} : vector<16x128xf32>, vector<128x128xf32>, vector<16x128xf32> -> vector<16x128xf32>
    %c0_3 = arith.constant 0 : index
    %c0_4 = arith.constant 0 : index
    %3 = vector.load %arg3[%c0_3, %c0_4] : memref<1x128xf32, #tpu.memory_space<vmem>>, vector<1x128xf32>
    %4 = vector.broadcast %3 : vector<1x128xf32> to vector<16x128xf32>
    %5 = arith.addf %2, %4 : vector<16x128xf32>
    %cst_5 = arith.constant 5.000000e-01 : f32
    %6 = vector.broadcast %cst_5 : f32 to vector<16x128xf32>
    %7 = arith.mulf %6, %5 : vector<16x128xf32>
    %cst_6 = arith.constant 0.707106769 : f32
    %8 = vector.broadcast %cst_6 : f32 to vector<16x128xf32>
    %9 = arith.mulf %5, %8 : vector<16x128xf32>
    %10 = math.erf %9 : vector<16x128xf32>
    %cst_7 = arith.constant 1.000000e+00 : f32
    %11 = vector.broadcast %cst_7 : f32 to vector<16x128xf32>
    %12 = arith.addf %11, %10 : vector<16x128xf32>
    %13 = arith.mulf %7, %12 : vector<16x128xf32>
    %c0_8 = arith.constant 0 : index
    %c0_9 = arith.constant 0 : index
    %14 = vector.load %arg4[%c0_8, %c0_9] : memref<128x128xf32, #tpu.memory_space<vmem>>, vector<128x128xf32>
    %cst_10 = arith.constant dense<0.000000e+00> : vector<16x128xf32>
    %15 = tpu.matmul %13, %14, %cst_10 {dimension_numbers = #tpu.dot_dimension_numbers<[1], [0], [0], [1], [0, 0, 1, 1], [], []>} : vector<16x128xf32>, vector<128x128xf32>, vector<16x128xf32> -> vector<16x128xf32>
    %c0_11 = arith.constant 0 : index
    %c0_12 = arith.constant 0 : index
    %16 = vector.load %arg5[%c0_11, %c0_12] : memref<1x128xf32, #tpu.memory_space<vmem>>, vector<1x128xf32>
    %17 = vector.broadcast %16 : vector<1x128xf32> to vector<16x128xf32>
    %18 = arith.addf %15, %17 : vector<16x128xf32>
    %cst_13 = arith.constant 5.000000e-01 : f32
    %19 = vector.broadcast %cst_13 : f32 to vector<16x128xf32>
    %20 = arith.mulf %19, %18 : vector<16x128xf32>
    %cst_14 = arith.constant 0.707106769 : f32
    %21 = vector.broadcast %cst_14 : f32 to vector<16x128xf32>
    %22 = arith.mulf %18, %21 : vector<16x128xf32>
    %23 = math.erf %22 : vector<16x128xf32>
    %cst_15 = arith.constant 1.000000e+00 : f32
    %24 = vector.broadcast %cst_15 : f32 to vector<16x128xf32>
    %25 = arith.addf %24, %23 : vector<16x128xf32>
    %26 = arith.mulf %20, %25 : vector<16x128xf32>
    %c0_16 = arith.constant 0 : index
    %c0_17 = arith.constant 0 : index
    %27 = vector.load %arg6[%c0_16, %c0_17] : memref<16x128xf32, #tpu.memory_space<vmem>>, vector<16x128xf32>
    tpu.vector_store %arg6[%c0_16, %c0_17], %26 {strides = array<i32>} : memref<16x128xf32, #tpu.memory_space<vmem>>, vector<16x128xf32>,
    return
  }
  func.func @transform_0(%arg0: i32) -> (i32, i32) {
    %c0_i32 = arith.constant 0 : i32
    %c0_i32_0 = arith.constant 0 : i32
    return %arg0, %c0_i32 : i32, i32
  }
  func.func @transform_1(%arg0: i32) -> (i32, i32) {
    %c0_i32 = arith.constant 0 : i32
    %c0_i32_0 = arith.constant 0 : i32
    %c0_i32_1 = arith.constant 0 : i32
    return %c0_i32, %c0_i32_0 : i32, i32
  }
  func.func @transform_2(%arg0: i32) -> (i32, i32) {
    %c0_i32 = arith.constant 0 : i32
    %c0_i32_0 = arith.constant 0 : i32
    %c0_i32_1 = arith.constant 0 : i32
    return %c0_i32, %c0_i32_0 : i32, i32
  }
  func.func @transform_3(%arg0: i32) -> (i32, i32) {
    %c0_i32 = arith.constant 0 : i32
    %c0_i32_0 = arith.constant 0 : i32
    %c0_i32_1 = arith.constant 0 : i32
    return %c0_i32, %c0_i32_0 : i32, i32
  }
  func.func @transform_4(%arg0: i32) -> (i32, i32) {
    %c0_i32 = arith.constant 0 : i32
    %c0_i32_0 = arith.constant 0 : i32
    %c0_i32_1 = arith.constant 0 : i32
    return %c0_i32, %c0_i32_0 : i32, i32
  }
  func.func @transform_5(%arg0: i32) -> (i32, i32) {
    %c0_i32 = arith.constant 0 : i32
    %c0_i32_0 = arith.constant 0 : i32
    return %arg0, %c0_i32 : i32, i32
  }
}

</mosaic_0001>

<llo_original>
// kernel: tpu_custom_call.1
$region0: #{tpu_custom_call.1}
  #allocation0 [shape = 'u32[]', space=smem, size = 0x4, offset = 0x4, fixed_abs, tag = 'smem constant byte address 0x4 - core index']
  #allocation1 [shape = 'u32[144,128]{1,0:T(1,128)}', space=vmem, size = 0x12000, scoped, tag = 'internal scratch']
  %s0 = inlined_call_operand.hbm [shape: f32[16,128], index: 0, kind: input, shape index: {}]
  %s1 = inlined_call_operand.hbm [shape: f32[128,128], index: 1, kind: input, shape index: {}]
  %s2 = inlined_call_operand.vmem [shape: f32[1,128], index: 2, kind: input, shape index: {}]
  %s3 = inlined_call_operand.hbm [shape: f32[128,128], index: 3, kind: input, shape index: {}]
  %s4 = inlined_call_operand.vmem [shape: f32[1,128], index: 4, kind: input, shape index: {}]
  %s5 = inlined_call_operand.hbm [shape: f32[16,128], index: 5, kind: output, shape index: {}]
  %s6 = sld [smem:[#allocation0]]
  $region42: #{tpu_custom_call.1} parent=0
    _
  %s8 = ssub.s32 1, %s6
  %s9 = scalar_select 0, %s8, %s6
  $region1: #{tpu_custom_call.1} parent=0
    #allocation2 [shape = 'u8[8192]{0}', space=vmem, size = 0x2000, scoped, tag = 'input window, operand 0, single buffered']
    #allocation3 [shape = 's32[1]{0}', space=sflag, size = 0x4, scoped, tag = 'scoped memory for tpu_custom_call.1']
    #allocation4 [shape = 's32[1]{0}', space=sflag, size = 0x4, scoped, tag = 'scoped memory for tpu_custom_call.1']
    #allocation5 [shape = 'u8[65536]{0}', space=vmem, size = 0x10000, scoped, tag = 'input window, operand 1, single buffered']
    #allocation6 [shape = 's32[1]{0}', space=sflag, size = 0x4, scoped, tag = 'scoped memory for tpu_custom_call.1']
    #allocation7 [shape = 'u8[65536]{0}', space=vmem, size = 0x10000, scoped, tag = 'input window, operand 3, single buffered']
    #allocation8 [shape = 'u8[8192]{0}', space=vmem, size = 0x2000, scoped, tag = 'output window, operand 0, single buffered']
    %10 = vsyncpa [#allocation3], 0
    %11 = vsyncpa [#allocation6], 0
    %12 = vsyncpa [#allocation4], 0
    // Predicated region
    $region2: #{tpu_custom_call.1} parent=1 // pred_check
      _
    $region3: #{tpu_custom_call.1} parent=1 // pred_check_branch
      %14 = sbr.rel (0) target = $region5
    $region4: #{tpu_custom_call.1} parent=1 // pred_region
      %s16 = ssub.s32 256, 256
      %17 = vsyncadd [#allocation3], %s16
      %s18 = sshll.u32 [#allocation2], 4
      %s19 = int_to_ptr.vmem [resolvable:$true] %s18
      %24 = dma.hbm_to_vmem [thread:$0]  %s0, 256, %s19, [#allocation3], 128, 128, 8
    $region5: #{tpu_custom_call.1} parent=1 // pred_fallthru
      _
    // Predicated region
    $region6: #{tpu_custom_call.1} parent=1 // pred_check
      _
    $region7: #{tpu_custom_call.1} parent=1 // pred_check_branch
      %26 = sbr.rel (0) target = $region9
    $region8: #{tpu_custom_call.1} parent=1 // pred_region
      %s28 = ssub.s32 2048, 2048
      %29 = vsyncadd [#allocation6], %s28
      %s30 = sshll.u32 [#allocation5], 4
      %s31 = int_to_ptr.vmem [resolvable:$true] %s30
      %36 = dma.hbm_to_vmem [thread:$0]  %s1, 2048, %s31, [#allocation6], 128, 128, 8
    $region9: #{tpu_custom_call.1} parent=1 // pred_fallthru
      _
    // Predicated region
    $region10: #{tpu_custom_call.1} parent=1 // pred_check
      _
    $region11: #{tpu_custom_call.1} parent=1 // pred_check_branch
      %38 = sbr.rel (0) target = $region13
    $region12: #{tpu_custom_call.1} parent=1 // pred_region
      _
    $region13: #{tpu_custom_call.1} parent=1 // pred_fallthru
      _
    // Predicated region
    $region14: #{tpu_custom_call.1} parent=1 // pred_check
      _
    $region15: #{tpu_custom_call.1} parent=1 // pred_check_branch
      %40 = sbr.rel (0) target = $region17
    $region16: #{tpu_custom_call.1} parent=1 // pred_region
      %s42 = ssub.s32 2048, 2048
      %43 = vsyncadd [#allocation6], %s42
      %s44 = sshll.u32 [#allocation7], 4
      %s45 = int_to_ptr.vmem [resolvable:$true] %s44
      %50 = dma.hbm_to_vmem [thread:$0]  %s3, 2048, %s45, [#allocation6], 128, 128, 8
    $region17: #{tpu_custom_call.1} parent=1 // pred_fallthru
      _
    // Predicated region
    $region18: #{tpu_custom_call.1} parent=1 // pred_check
      _
    $region19: #{tpu_custom_call.1} parent=1 // pred_check_branch
      %52 = sbr.rel (0) target = $region21
    $region20: #{tpu_custom_call.1} parent=1 // pred_region
      _
    $region21: #{tpu_custom_call.1} parent=1 // pred_fallthru
      _
    // Predicated region
    $region22: #{tpu_custom_call.1} parent=1 // pred_check
      _
    $region23: #{tpu_custom_call.1} parent=1 // pred_check_branch
      %54 = sbr.rel (0) target = $region25
    $region24: #{tpu_custom_call.1} parent=1 // pred_region
      %55 = dma.done [#allocation3], 256
    $region25: #{tpu_custom_call.1} parent=1 // pred_fallthru
      _
    // Predicated region
    $region26: #{tpu_custom_call.1} parent=1 // pred_check
      _
    $region27: #{tpu_custom_call.1} parent=1 // pred_check_branch
      %57 = sbr.rel (0) target = $region29
    $region28: #{tpu_custom_call.1} parent=1 // pred_region
      %58 = dma.done [#allocation6], 2048
    $region29: #{tpu_custom_call.1} parent=1 // pred_fallthru
      _
    // Predicated region
    $region30: #{tpu_custom_call.1} parent=1 // pred_check
      _
    $region31: #{tpu_custom_call.1} parent=1 // pred_check_branch
      %60 = sbr.rel (0) target = $region33
    $region32: #{tpu_custom_call.1} parent=1 // pred_region
      %61 = dma.done [#allocation6], 2048
    $region33: #{tpu_custom_call.1} parent=1 // pred_fallthru
      _
    %v62 = vld [vmem:[#allocation2] sm:$0xff]
    %v63 = vld [vmem:[#allocation2 + $0x8] sm:$0xff]
    %v64 = vld [vmem:[#allocation5] sm:$0xff]
    %v65 = vld [vmem:[#allocation5 + $0x8] sm:$0xff]
    %v66 = vld [vmem:[#allocation5 + $0x10] sm:$0xff]
    %v67 = vld [vmem:[#allocation5 + $0x18] sm:$0xff]
    %v68 = vld [vmem:[#allocation5 + $0x20] sm:$0xff]
    %v69 = vld [vmem:[#allocation5 + $0x28] sm:$0xff]
    %v70 = vld [vmem:[#allocation5 + $0x30] sm:$0xff]
    %v71 = vld [vmem:[#allocation5 + $0x38] sm:$0xff]
    %v72 = vld [vmem:[#allocation5 + $0x40] sm:$0xff]
    %v73 = vld [vmem:[#allocation5 + $0x48] sm:$0xff]
    %v74 = vld [vmem:[#allocation5 + $0x50] sm:$0xff]
    %v75 = vld [vmem:[#allocation5 + $0x58] sm:$0xff]
    %v76 = vld [vmem:[#allocation5 + $0x60] sm:$0xff]
    %v77 = vld [vmem:[#allocation5 + $0x68] sm:$0xff]
    %v78 = vld [vmem:[#allocation5 + $0x70] sm:$0xff]
    %v79 = vld [vmem:[#allocation5 + $0x78] sm:$0xff]
    %v80 = vld [vmem:[%s2] sm:$0x1]
    %v82 = vlaneseq
    %v83 = vshrl.u32 %v82, 7
    %v84 = vsub.s32 0, %v83
    %v85 = vrot.slane %v80, %v84
    %87 = vmatprep.subr.mxu0 0.0
    %88 = vmatpush1.msra.mxu0 %v64
    %89 = vmatprep.subr.mxu0 0.0
    %90 = vmatpush1.msra.mxu0 %v65
    %91 = vmatprep.subr.mxu0 0.0
    %92 = vmatpush1.msra.mxu0 %v66
    %93 = vmatprep.subr.mxu0 0.0
    %94 = vmatpush1.msra.mxu0 %v67
    %95 = vmatprep.subr.mxu0 0.0
    %96 = vmatpush1.msra.mxu0 %v68
    %97 = vmatprep.subr.mxu0 0.0
    %98 = vmatpush1.msra.mxu0 %v69
    %99 = vmatprep.subr.mxu0 0.0
    %100 = vmatpush1.msra.mxu0 %v70
    %101 = vmatprep.subr.mxu0 0.0
    %102 = vmatpush1.msra.mxu0 %v71
    %103 = vmatprep.subr.mxu0 0.0
    %104 = vmatpush1.msra.mxu0 %v72
    %105 = vmatprep.subr.mxu0 0.0
    %106 = vmatpush1.msra.mxu0 %v73
    %107 = vmatprep.subr.mxu0 0.0
    %108 = vmatpush1.msra.mxu0 %v74
    %109 = vmatprep.subr.mxu0 0.0
    %110 = vmatpush1.msra.mxu0 %v75
    %111 = vmatprep.subr.mxu0 0.0
    %112 = vmatpush1.msra.mxu0 %v76
    %113 = vmatprep.subr.mxu0 0.0
    %114 = vmatpush1.msra.mxu0 %v77
    %115 = vmatprep.subr.mxu0 0.0
    %116 = vmatpush1.msra.mxu0 %v78
    %117 = vmatprep.subr.mxu0 0.0
    %118 = vmatpush1.msra.mxu0 %v79
    %119 = vmatprep.subr.mxu0 0.0
    %120 = vmatpush1.msra.mxu0 0.0
    %121 = vmatprep.subr.mxu0 0.0
    %122 = vmatpush1.msra.mxu0 0.0
    %123 = vmatprep.subr.mxu0 0.0
    %124 = vmatpush1.msra.mxu0 0.0
    %125 = vmatprep.subr.mxu0 0.0
    %126 = vmatpush1.msra.mxu0 0.0
    %127 = vmatprep.subr.mxu0 0.0
    %128 = vmatpush1.msra.mxu0 0.0
    %129 = vmatprep.subr.mxu0 0.0
    %130 = vmatpush1.msra.mxu0 0.0
    %131 = vmatprep.subr.mxu0 0.0
    %132 = vmatpush1.msra.mxu0 0.0
    %133 = vmatprep.subr.mxu0 0.0
    %134 = vmatpush1.msra.mxu0 0.0
    %135 = vmatprep.subr.mxu0 0.0
    %136 = vmatpush1.msra.mxu0 0.0
    %137 = vmatprep.subr.mxu0 0.0
    %138 = vmatpush1.msra.mxu0 0.0
    %139 = vmatprep.subr.mxu0 0.0
    %140 = vmatpush1.msra.mxu0 0.0
    %141 = vmatprep.subr.mxu0 0.0
    %142 = vmatpush1.msra.mxu0 0.0
    %143 = vmatprep.subr.mxu0 0.0
    %144 = vmatpush1.msra.mxu0 0.0
    %145 = vmatprep.subr.mxu0 0.0
    %146 = vmatpush1.msra.mxu0 0.0
    %147 = vmatprep.subr.mxu0 0.0
    %148 = vmatpush1.msra.mxu0 0.0
    %149 = vmatprep.subr.mxu0 0.0
    %150 = vmatpush1.msra.mxu0 0.0
    %151 = vmatprep.mubr.f32.mxu0 0.0
    %152 = vmatmul.mubr.f32.gmra.mrb[0].mxu0 %v62
    %v153 = vpop.f32.mrb[0].mxu0
    %v154 = vadd.f32 %v85, %v153
    %v155 = vpop.f32.mrb[0].mxu0
    %156 = vmatprep.mubr.f32.mxu0 0.0
    %157 = vmatmul.mubr.f32.gmra.mrb[0].mxu0 %v63
    %v158 = vpop.f32.mrb[0].mxu0
    %v159 = vadd.f32 %v85, %v158
    %v160 = vpop.f32.mrb[0].mxu0
    %161 = vdwg.mxu0
    %v162 = vmul.f32 %v154, 0.5
    %v163 = vmul.f32 %v159, 0.5
    %v164 = vmul.f32 %v154, 0.70710677
    %v165 = vmul.f32 %v159, 0.70710677
    %v166 = verf.f32.pop %v164
    %v167 = verf.f32.pop %v165
    %v168 = vadd.f32 %v166, 1.0
    %v169 = vadd.f32 %v167, 1.0
    %v170 = vmul.f32 %v162, %v168
    %v171 = vmul.f32 %v163, %v169
    %v172 = vld [vmem:[#allocation7] sm:$0xff]
    %v173 = vld [vmem:[#allocation7 + $0x8] sm:$0xff]
    %v174 = vld [vmem:[#allocation7 + $0x10] sm:$0xff]
    %v175 = vld [vmem:[#allocation7 + $0x18] sm:$0xff]
    %v176 = vld [vmem:[#allocation7 + $0x20] sm:$0xff]
    %v177 = vld [vmem:[#allocation7 + $0x28] sm:$0xff]
    %v178 = vld [vmem:[#allocation7 + $0x30] sm:$0xff]
    %v179 = vld [vmem:[#allocation7 + $0x38] sm:$0xff]
    %v180 = vld [vmem:[#allocation7 + $0x40] sm:$0xff]
    %v181 = vld [vmem:[#allocation7 + $0x48] sm:$0xff]
    %v182 = vld [vmem:[#allocation7 + $0x50] sm:$0xff]
    %v183 = vld [vmem:[#allocation7 + $0x58] sm:$0xff]
    %v184 = vld [vmem:[#allocation7 + $0x60] sm:$0xff]
    %v185 = vld [vmem:[#allocation7 + $0x68] sm:$0xff]
    %v186 = vld [vmem:[#allocation7 + $0x70] sm:$0xff]
    %v187 = vld [vmem:[#allocation7 + $0x78] sm:$0xff]
    %v188 = vld [vmem:[%s4] sm:$0x1]
    %v190 = vlaneseq
    %v191 = vshrl.u32 %v190, 7
    %v192 = vsub.s32 0, %v191
    %v193 = vrot.slane %v188, %v192
    %195 = vmatprep.subr.mxu0 0.0
    %196 = vmatpush1.msra.mxu0 %v172
    %197 = vmatprep.subr.mxu0 0.0
    %198 = vmatpush1.msra.mxu0 %v173
    %199 = vmatprep.subr.mxu0 0.0
    %200 = vmatpush1.msra.mxu0 %v174
    %201 = vmatprep.subr.mxu0 0.0
    %202 = vmatpush1.msra.mxu0 %v175
    %203 = vmatprep.subr.mxu0 0.0
    %204 = vmatpush1.msra.mxu0 %v176
    %205 = vmatprep.subr.mxu0 0.0
    %206 = vmatpush1.msra.mxu0 %v177
    %207 = vmatprep.subr.mxu0 0.0
    %208 = vmatpush1.msra.mxu0 %v178
    %209 = vmatprep.subr.mxu0 0.0
    %210 = vmatpush1.msra.mxu0 %v179
    %211 = vmatprep.subr.mxu0 0.0
    %212 = vmatpush1.msra.mxu0 %v180
    %213 = vmatprep.subr.mxu0 0.0
    %214 = vmatpush1.msra.mxu0 %v181
    %215 = vmatprep.subr.mxu0 0.0
    %216 = vmatpush1.msra.mxu0 %v182
    %217 = vmatprep.subr.mxu0 0.0
    %218 = vmatpush1.msra.mxu0 %v183
    %219 = vmatprep.subr.mxu0 0.0
    %220 = vmatpush1.msra.mxu0 %v184
    %221 = vmatprep.subr.mxu0 0.0
    %222 = vmatpush1.msra.mxu0 %v185
    %223 = vmatprep.subr.mxu0 0.0
    %224 = vmatpush1.msra.mxu0 %v186
    %225 = vmatprep.subr.mxu0 0.0
    %226 = vmatpush1.msra.mxu0 %v187
    %227 = vmatprep.subr.mxu0 0.0
    %228 = vmatpush1.msra.mxu0 0.0
    %229 = vmatprep.subr.mxu0 0.0
    %230 = vmatpush1.msra.mxu0 0.0
    %231 = vmatprep.subr.mxu0 0.0
    %232 = vmatpush1.msra.mxu0 0.0
    %233 = vmatprep.subr.mxu0 0.0
    %234 = vmatpush1.msra.mxu0 0.0
    %235 = vmatprep.subr.mxu0 0.0
    %236 = vmatpush1.msra.mxu0 0.0
    %237 = vmatprep.subr.mxu0 0.0
    %238 = vmatpush1.msra.mxu0 0.0
    %239 = vmatprep.subr.mxu0 0.0
    %240 = vmatpush1.msra.mxu0 0.0
    %241 = vmatprep.subr.mxu0 0.0
    %242 = vmatpush1.msra.mxu0 0.0
    %243 = vmatprep.subr.mxu0 0.0
    %244 = vmatpush1.msra.mxu0 0.0
    %245 = vmatprep.subr.mxu0 0.0
    %246 = vmatpush1.msra.mxu0 0.0
    %247 = vmatprep.subr.mxu0 0.0
    %248 = vmatpush1.msra.mxu0 0.0
    %249 = vmatprep.subr.mxu0 0.0
    %250 = vmatpush1.msra.mxu0 0.0
    %251 = vmatprep.subr.mxu0 0.0
    %252 = vmatpush1.msra.mxu0 0.0
    %253 = vmatprep.subr.mxu0 0.0
    %254 = vmatpush1.msra.mxu0 0.0
    %255 = vmatprep.subr.mxu0 0.0
    %256 = vmatpush1.msra.mxu0 0.0
    %257 = vmatprep.subr.mxu0 0.0
    %258 = vmatpush1.msra.mxu0 0.0
    %259 = vmatprep.mubr.f32.mxu0 0.0
    %260 = vmatmul.mubr.f32.gmra.mrb[0].mxu0 %v170
    %v261 = vpop.f32.mrb[0].mxu0
    %v262 = vadd.f32 %v193, %v261
    %v263 = vpop.f32.mrb[0].mxu0
    %264 = vmatprep.mubr.f32.mxu0 0.0
    %265 = vmatmul.mubr.f32.gmra.mrb[0].mxu0 %v171
    %v266 = vpop.f32.mrb[0].mxu0
    %v267 = vadd.f32 %v193, %v266
    %v268 = vpop.f32.mrb[0].mxu0
    %269 = vdwg.mxu0
    %v270 = vmul.f32 %v262, 0.5
    %v271 = vmul.f32 %v267, 0.5
    %v272 = vmul.f32 %v262, 0.70710677
    %v273 = vmul.f32 %v267, 0.70710677
    %v274 = verf.f32.pop %v272
    %v275 = verf.f32.pop %v273
    %v276 = vadd.f32 %v274, 1.0
    %v277 = vadd.f32 %v275, 1.0
    %v278 = vmul.f32 %v270, %v276
    %v279 = vmul.f32 %v271, %v277
    %280 = vst [vmem:[#allocation8] sm:$0xff] %v278
    %281 = vst [vmem:[#allocation8 + $0x8] sm:$0xff] %v279
    // Predicated region
    $region34: #{tpu_custom_call.1} parent=1 // pred_check
      _
    $region35: #{tpu_custom_call.1} parent=1 // pred_check_branch
      %283 = sbr.rel (0) target = $region37
    $region36: #{tpu_custom_call.1} parent=1 // pred_region
      %s285 = ssub.s32 256, 256
      %286 = vsyncadd [#allocation4], %s285
      %s287 = sshll.u32 [#allocation8], 4
      %s288 = int_to_ptr.vmem [resolvable:$true] %s287
      %293 = dma.vmem_to_hbm [thread:$0]  %s288, 256, %s5, [#allocation4], 128, 128, 8
    $region37: #{tpu_custom_call.1} parent=1 // pred_fallthru
      _
    // Predicated region
    $region38: #{tpu_custom_call.1} parent=1 // pred_check
      _
    $region39: #{tpu_custom_call.1} parent=1 // pred_check_branch
      %295 = sbr.rel (0) target = $region41
    $region40: #{tpu_custom_call.1} parent=1 // pred_region
      %296 = dma.done [#allocation4], 256
    $region41: #{tpu_custom_call.1} parent=1 // pred_fallthru
      _
    %297 = vsyncpa [#allocation3], 1
    %298 = vsyncpa [#allocation6], 1
    %299 = vsyncpa [#allocation4], 1

</llo_original>
